<compile_context>
chip_gen: v7x
topology: tpu7x:2x2x1
jax: 0.10.0
libtpu: 0.0.40
codegen_flags: <defaults>
</compile_context>

<pallas_src>
import functools
import math

import jax
import jax.numpy as jnp
from jax import lax
from jax.experimental import pallas as pl
from jax.experimental.pallas import tpu as pltpu


def _round_up(x, m):
    return (x + m - 1) // m * m


def _round_down(x, m):
    return x // m * m


def _exact_gelu(x):
    # PyTorch F.gelu default is the exact erf formulation.
    return 0.5 * x * (1.0 + lax.erf(x * (1.0 / math.sqrt(2.0))))


# ----------------------------------------------------------------------------
# Kernels
# ----------------------------------------------------------------------------

def _folded_mlp_kernel(x_ref, w_ref, o_ref, *, depth):
    # x_ref: (tm, dim) pipelined row tile; w_ref: (depth, dim, dim) resident.
    mx = w_ref.dtype
    x = x_ref[...].astype(jnp.float32)   # running activation stays f32
    # TODO(synk): for depth >~ 8 switch to lax.fori_loop (peel layer 0 for the
    # d != 0 GELU) or stage per-layer weights with pltpu.emit_pipeline instead
    # of holding the whole stack resident / fully unrolling.
    for d in range(depth):                # depth is static -> unrolled
        if d != 0:
            x = _exact_gelu(x)            # f32 elementwise (EUP/VPU)
        x = jnp.dot(x.astype(mx), w_ref[d],
                    preferred_element_type=jnp.float32)
    o_ref[...] = x.astype(o_ref.dtype)


def _factorized_mlp_kernel(x_ref, w1_ref, w2_ref, o_ref, *, depth):
    # x_ref : (tm, dim); w1_ref: (depth, dim, k_pad); w2_ref: (depth, k_pad, dim)
    mx = jnp.dtype(w1_ref.dtype)
    # bf16 weights: keep h at the MXU dtype (accumulation is f32 inside the MXU
    # either way) -> no extra VPU cast pass. f32 weights: exact f32 intermediate.
    h_dtype = jnp.dtype(jnp.float32) if mx == jnp.dtype(jnp.float32) else mx
    x = x_ref[...].astype(jnp.float32)
    for d in range(depth):
        if d != 0:
            x = _exact_gelu(x)
        h = jnp.dot(x.astype(mx), w1_ref[d], preferred_element_type=h_dtype)
        x = jnp.dot(h.astype(mx), w2_ref[d], preferred_element_type=jnp.float32)
    o_ref[...] = x.astype(o_ref.dtype)


# ----------------------------------------------------------------------------
# One-time weight preparation (hoisted out of the per-call path)
# ----------------------------------------------------------------------------

def prepare_factorized_weights(w1_stack, w2_stack, *, mxu_dtype=None, fold=None):
    """Fold / lane-pad / cast the weight stacks once.

    - folds w1[d] @ w2[d] into a single (dim, dim) matrix per layer (computed
      in f32) whenever dim <= 2*k_pad: one MXU pass per layer instead of two,
    - otherwise zero-pads k to a lane-dense multiple of 128 (mathematically
      exact),
    - optionally casts to `mxu_dtype` (e.g. bf16 for ~2x MXU rate on
      v5e/v6e/v7x; activations/GELU stay f32 inside the kernel).
    """
    depth, dim, k = w1_stack.shape
    assert w2_stack.shape == (depth, k, dim)
    k_pad = _round_up(k, 128)
    if fold is None:
        fold = dim <= 2 * k_pad
    out_dtype = jnp.dtype(mxu_dtype) if mxu_dtype is not None else jnp.dtype(
        w1_stack.dtype)
    if fold:
        w = jnp.einsum("dik,dkj->dij",
                       w1_stack.astype(jnp.float32),
                       w2_stack.astype(jnp.float32))
        return ("folded", w.astype(out_dtype))
    if k_pad != k:
        w1_stack = jnp.pad(w1_stack, ((0, 0), (0, 0), (0, k_pad - k)))
        w2_stack = jnp.pad(w2_stack, ((0, 0), (0, k_pad - k), (0, 0)))
    return ("factorized",
            w1_stack.astype(out_dtype), w2_stack.astype(out_dtype))


# ----------------------------------------------------------------------------
# VMEM planning (generation-aware)
# ----------------------------------------------------------------------------

def _vmem_plan(tm, dim, inner_dim, io_itemsize, weight_bytes, row_align):
    try:
        cap = int(pltpu.get_tpu_info().vmem_capacity_bytes)  # 128MiB v5e/v6e, 64MiB v7x
    except Exception:
        cap = 64 << 20                                       # conservative fallback
    cap = min(cap, 128 << 20)
    budget = cap - (6 << 20)                                 # compiler-internal headroom
    # Per-row VMEM: double-buffered in/out row tiles + ~4 co-live f32
    # intermediates (old x, matmul result, GELU temp, dtype-cast copy) in the
    # unrolled body — conservative so v7x's 64 MiB core never spills/OOMs.
    per_row = 2 * 2 * dim * io_itemsize + 4 * max(dim, inner_dim) * 4
    avail = budget - weight_bytes
    assert avail >= per_row * row_align, (
        "weight stack does not fit in VMEM alongside a minimal row tile; "
        "stage per-layer weights via pl.ANY + pltpu.emit_pipeline instead")
    tm_fit = max(row_align, _round_down(avail // per_row, row_align))
    tm = min(tm, tm_fit)
    needed = weight_bytes + per_row * tm
    vmem_limit = int(min(max(needed + (8 << 20), 32 << 20), cap))
    return tm, vmem_limit


# ----------------------------------------------------------------------------
# Wrapper
# ----------------------------------------------------------------------------

def factorized_memory_mlp(x, w1_or_prepared, w2_stack=None, *, tile_rows=512,
                          io_dtype=None):
    """FactorizedMemoryMLP forward.

    x              : (batch, seq, dim)
    w1_or_prepared : raw (depth, dim, k) w1 stack, or the output of
                     prepare_factorized_weights() (preferred: hoists the
                     fold / pad / cast out of the per-call path).
    w2_stack       : raw (depth, k, dim) w2 stack when passing raw weights.
    tile_rows      : row-tile target; auto-clamped to the VMEM budget.
    io_dtype       : optional activation I/O dtype (e.g. jnp.bfloat16) to halve
                     the row-stream HBM traffic; GELU/accumulation stay f32.
    """
    prepared = (prepare_factorized_weights(w1_or_prepared, w2_stack)
                if w2_stack is not None else w1_or_prepared)
    kind = prepared[0]

    batch, seq, dim = x.shape
    rows = batch * seq
    out_dtype = jnp.dtype(io_dtype) if io_dtype is not None else x.dtype

    x2d = x.reshape(rows, dim)            # free (contiguous); no pad/slice copies
    if x2d.dtype != out_dtype:
        x2d = x2d.astype(out_dtype)
    io_itemsize = jnp.dtype(x2d.dtype).itemsize
    row_align = 8 if io_itemsize >= 4 else (16 if io_itemsize == 2 else 32)

    if kind == "folded":
        _, w = prepared
        depth = w.shape[0]
        assert w.shape == (depth, dim, dim)
        weight_args = (w,)
        weight_bytes = w.size * jnp.dtype(w.dtype).itemsize
        inner_dim = dim
        kernel = functools.partial(_folded_mlp_kernel, depth=depth)
    else:
        _, w1, w2 = prepared
        depth, dw, k_pad = w1.shape
        assert dw == dim and w2.shape == (depth, k_pad, dim)
        weight_args = (w1, w2)
        weight_bytes = (w1.size + w2.size) * jnp.dtype(w1.dtype).itemsize
        inner_dim = k_pad
        kernel = functools.partial(_factorized_mlp_kernel, depth=depth)

    # Row tiling. Ragged last block handled by Pallas: OOB reads give garbage
    # confined to the padded rows (rows are independent), OOB writes discarded.
    tm = max(row_align, _round_up(min(tile_rows, rows), row_align))
    # v7x has 2 TensorCores sharing the ("parallel",) row axis: ensure >= 2
    # grid steps whenever there is enough work to split (cheap on 1-TC chips).
    if pl.cdiv(rows, tm) < 2 and rows > row_align:
        tm = max(row_align, _round_up(pl.cdiv(rows, 2), row_align))
    tm, vmem_limit = _vmem_plan(tm, dim, inner_dim, io_itemsize,
                                weight_bytes, row_align)
    grid = (pl.cdiv(rows, tm),)

    weight_specs = [pl.BlockSpec(memory_space=pltpu.MemorySpace.VMEM)
                    for _ in weight_args]   # whole stacks resident once, no re-DMA

    out2d = pl.pallas_call(
        kernel,
        out_shape=jax.ShapeDtypeStruct((rows, dim), out_dtype),
        grid_spec=pltpu.PrefetchScalarGridSpec(
            num_scalar_prefetch=0,
            grid=grid,
            in_specs=[pl.BlockSpec((tm, dim), lambda i: (i, 0))] + weight_specs,
            out_specs=pl.BlockSpec((tm, dim), lambda i: (i, 0)),
        ),
        compiler_params=pltpu.CompilerParams(
            dimension_semantics=("parallel",),
            vmem_limit_bytes=vmem_limit),
    )(x2d, *weight_args)

    return out2d.reshape(batch, seq, dim)


# ----------------------------------------------------------------------------
# Reference + test
# ----------------------------------------------------------------------------

def _xavier_uniform(key, shape):
    fan_out, fan_in = shape
    bound = math.sqrt(6.0 / (fan_in + fan_out))
    return jax.random.uniform(key, shape, jnp.float32, -bound, bound)


def _reference(x, w1_stack, w2_stack):
    depth = w1_stack.shape[0]
    y = x
    for d in range(depth):
        if d != 0:
            y = _exact_gelu(y)
        y = y @ w1_stack[d] @ w2_stack[d]
    return y


if __name__ == "__main__":
    # Small, module-consistent shapes.
    batch, seq, dim, k, depth = 2, 8, 128, 32, 3

    key = jax.random.PRNGKey(0)
    kx, kx2, *wkeys = jax.random.split(key, 2 + 2 * depth)

    x = jax.random.normal(kx, (batch, seq, dim), jnp.float32)
    w1_stack = jnp.stack(
        [_xavier_uniform(wkeys[2 * d], (dim, k)) for d in range(depth)])
    w2_stack = jnp.stack(
        [_xavier_uniform(wkeys[2 * d + 1], (k, dim)) for d in range(depth)])

    ref = _reference(x, w1_stack, w2_stack)

    # 1) raw weights, f32: folded (dim <= 2*k_pad) single-matmul-per-layer path.
    out = jax.block_until_ready(factorized_memory_mlp(x, w1_stack, w2_stack))
    assert out.shape == (batch, seq, dim)
    assert jnp.allclose(out, ref, atol=1e-4, rtol=1e-4), "folded f32 mismatch"

    # 2) pre-prepared weights (fold/pad/cast hoisted out of the call path).
    prep = prepare_factorized_weights(w1_stack, w2_stack)
    out_p = jax.block_until_ready(factorized_memory_mlp(x, prep))
    assert jnp.allclose(out_p, ref, atol=1e-4, rtol=1e-4), "prepared mismatch"

    # 3) factorized (two-matmul) path, ragged rows + multi-step grid
    #    (exercises the no-pad partial-block path).
    x3 = jax.random.normal(kx2, (3, 40, dim), jnp.float32)
    ref3 = _reference(x3, w1_stack, w2_stack)
    prep_fac = prepare_factorized_weights(w1_stack, w2_stack, fold=False)
    out3 = jax.block_until_ready(
        factorized_memory_mlp(x3, prep_fac, tile_rows=64))
    assert jnp.allclose(out3, ref3, atol=1e-4, rtol=1e-4), "ragged mismatch"

    # 4) bf16 weights on the MXU + bf16 activation I/O (perf path;
    #    GELU/accumulation stay f32 inside the kernel).
    prep_bf16 = prepare_factorized_weights(w1_stack, w2_stack,
                                           mxu_dtype=jnp.bfloat16)
    out_bf16 = jax.block_until_ready(
        factorized_memory_mlp(x, prep_bf16, io_dtype=jnp.bfloat16))
    assert jnp.allclose(out_bf16.astype(jnp.float32), ref,
                        atol=6e-2, rtol=6e-2), "bf16 mismatch"

    print("KERNEL_OK")
</pallas_src>

<mosaic_0001>
module attributes {stable_mosaic.version = 11 : i64} {
  func.func @_folded_mlp_kernel(%arg0: i32, %arg1: memref<8x128xf32, #tpu.memory_space<vmem>>, %arg2: memref<3x128x128xf32, #tpu.memory_space<vmem>>, %arg3: memref<8x128xf32, #tpu.memory_space<vmem>>) attributes {dimension_semantics = [#tpu.dimension_semantics<parallel>], iteration_bounds = array<i64: 2>, scalar_prefetch = 0 : i64, scratch_operands = 0 : i64, tpu.core_type = #tpu.core_type<tc>, window_params = [{transform_indices = @transform_0, window_bounds = array<i64: 8, 128>}, {pipeline_mode = #tpu.pipeline_mode<synchronous>, transform_indices = @transform_1, window_bounds = array<i64: 3, 128, 128>}, {transform_indices = @transform_2, window_bounds = array<i64: 8, 128>}]} {
    %c0 = arith.constant 0 : index
    %c0_0 = arith.constant 0 : index
    %0 = vector.load %arg1[%c0, %c0_0] : memref<8x128xf32, #tpu.memory_space<vmem>>, vector<8x128xf32>
    %c0_1 = arith.constant 0 : index
    %c0_2 = arith.constant 0 : index
    %c0_3 = arith.constant 0 : index
    %1 = vector.load %arg2[%c0_1, %c0_2, %c0_3] : memref<3x128x128xf32, #tpu.memory_space<vmem>>, vector<1x128x128xf32>
    %2 = vector.shape_cast %1 : vector<1x128x128xf32> to vector<128x128xf32>
    %cst = arith.constant dense<0.000000e+00> : vector<8x128xf32>
    %3 = tpu.matmul %0, %2, %cst {dimension_numbers = #tpu.dot_dimension_numbers<[1], [0], [0], [1], [0, 0, 1, 1], [], []>} : vector<8x128xf32>, vector<128x128xf32>, vector<8x128xf32> -> vector<8x128xf32>
    %cst_4 = arith.constant 5.000000e-01 : f32
    %4 = vector.broadcast %cst_4 : f32 to vector<8x128xf32>
    %5 = arith.mulf %4, %3 : vector<8x128xf32>
    %cst_5 = arith.constant 0.707106769 : f32
    %6 = vector.broadcast %cst_5 : f32 to vector<8x128xf32>
    %7 = arith.mulf %3, %6 : vector<8x128xf32>
    %8 = math.erf %7 : vector<8x128xf32>
    %cst_6 = arith.constant 1.000000e+00 : f32
    %9 = vector.broadcast %cst_6 : f32 to vector<8x128xf32>
    %10 = arith.addf %9, %8 : vector<8x128xf32>
    %11 = arith.mulf %5, %10 : vector<8x128xf32>
    %c1 = arith.constant 1 : index
    %c0_7 = arith.constant 0 : index
    %c0_8 = arith.constant 0 : index
    %12 = vector.load %arg2[%c1, %c0_7, %c0_8] : memref<3x128x128xf32, #tpu.memory_space<vmem>>, vector<1x128x128xf32>
    %13 = vector.shape_cast %12 : vector<1x128x128xf32> to vector<128x128xf32>
    %cst_9 = arith.constant dense<0.000000e+00> : vector<8x128xf32>
    %14 = tpu.matmul %11, %13, %cst_9 {dimension_numbers = #tpu.dot_dimension_numbers<[1], [0], [0], [1], [0, 0, 1, 1], [], []>} : vector<8x128xf32>, vector<128x128xf32>, vector<8x128xf32> -> vector<8x128xf32>
    %cst_10 = arith.constant 5.000000e-01 : f32
    %15 = vector.broadcast %cst_10 : f32 to vector<8x128xf32>
    %16 = arith.mulf %15, %14 : vector<8x128xf32>
    %cst_11 = arith.constant 0.707106769 : f32
    %17 = vector.broadcast %cst_11 : f32 to vector<8x128xf32>
    %18 = arith.mulf %14, %17 : vector<8x128xf32>
    %19 = math.erf %18 : vector<8x128xf32>
    %cst_12 = arith.constant 1.000000e+00 : f32
    %20 = vector.broadcast %cst_12 : f32 to vector<8x128xf32>
    %21 = arith.addf %20, %19 : vector<8x128xf32>
    %22 = arith.mulf %16, %21 : vector<8x128xf32>
    %c2 = arith.constant 2 : index
    %c0_13 = arith.constant 0 : index
    %c0_14 = arith.constant 0 : index
    %23 = vector.load %arg2[%c2, %c0_13, %c0_14] : memref<3x128x128xf32, #tpu.memory_space<vmem>>, vector<1x128x128xf32>
    %24 = vector.shape_cast %23 : vector<1x128x128xf32> to vector<128x128xf32>
    %cst_15 = arith.constant dense<0.000000e+00> : vector<8x128xf32>
    %25 = tpu.matmul %22, %24, %cst_15 {dimension_numbers = #tpu.dot_dimension_numbers<[1], [0], [0], [1], [0, 0, 1, 1], [], []>} : vector<8x128xf32>, vector<128x128xf32>, vector<8x128xf32> -> vector<8x128xf32>
    %c0_16 = arith.constant 0 : index
    %c0_17 = arith.constant 0 : index
    %26 = vector.load %arg3[%c0_16, %c0_17] : memref<8x128xf32, #tpu.memory_space<vmem>>, vector<8x128xf32>
    tpu.vector_store %arg3[%c0_16, %c0_17], %25 {strides = array<i32>} : memref<8x128xf32, #tpu.memory_space<vmem>>, vector<8x128xf32>,
    return
  }
  func.func @transform_0(%arg0: i32) -> (i32, i32) {
    %c0_i32 = arith.constant 0 : i32
    %c0_i32_0 = arith.constant 0 : i32
    return %arg0, %c0_i32 : i32, i32
  }
  func.func @transform_1(%arg0: i32) -> (i32, i32, i32) {
    %c0_i32 = arith.constant 0 : i32
    %c0_i32_0 = arith.constant 0 : i32
    %c0_i32_1 = arith.constant 0 : i32
    %c0_i32_2 = arith.constant 0 : i32
    return %c0_i32, %c0_i32_0, %c0_i32_1 : i32, i32, i32
  }
  func.func @transform_2(%arg0: i32) -> (i32, i32) {
    %c0_i32 = arith.constant 0 : i32
    %c0_i32_0 = arith.constant 0 : i32
    return %arg0, %c0_i32 : i32, i32
  }
}

</mosaic_0001>

<llo_original>
// kernel: tpu_custom_call.1
$region0: #{tpu_custom_call.1}
  #allocation0 [shape = 'u32[]', space=smem, size = 0x4, offset = 0x4, fixed_abs, tag = 'smem constant byte address 0x4 - core index']
  #allocation1 [shape = 'u32[144,128]{1,0:T(1,128)}', space=vmem, size = 0x12000, scoped, tag = 'internal scratch']
  %s0 = inlined_call_operand.hbm [shape: f32[16,128], index: 0, kind: input, shape index: {}]
  %s1 = inlined_call_operand.hbm [shape: f32[3,128,128], index: 1, kind: input, shape index: {}]
  %s2 = inlined_call_operand.hbm [shape: f32[16,128], index: 2, kind: output, shape index: {}]
  %s3 = sld [smem:[#allocation0]]
  $region49: #{tpu_custom_call.1} parent=0
    _
  %s5 = ssub.s32 1, %s3
  %s6 = scalar_select 0, %s5, %s3
  $region1: #{tpu_custom_call.1} parent=0
    #allocation2 [shape = 'u8[8192]{0}', space=vmem, size = 0x2000, scoped, tag = 'input window, operand 0']
    #allocation3 [shape = 's32[2]{0}', space=sflag, size = 0x8, scoped, tag = 'scoped memory for tpu_custom_call.1']
    #allocation4 [shape = 's32[2]{0}', space=sflag, size = 0x8, scoped, tag = 'scoped memory for tpu_custom_call.1']
    #allocation5 [shape = 'u8[196608]{0}', space=vmem, size = 0x30000, scoped, tag = 'input window, operand 1, single buffered']
    #allocation6 [shape = 's32[1]{0}', space=sflag, size = 0x4, scoped, tag = 'scoped memory for tpu_custom_call.1']
    #allocation7 [shape = 'u8[8192]{0}', space=vmem, size = 0x2000, scoped, tag = 'output window, operand 0']
    %7 = vsyncpa [#allocation3], 0
    %s8 = scalar_lea.sflag [#allocation3], 1
    %9 = vsyncpa %s8, 0
    %10 = vsyncpa [#allocation6], 0
    %11 = vsyncpa [#allocation4], 0
    %s12 = scalar_lea.sflag [#allocation4], 1
    %13 = vsyncpa %s12, 0
    loop: start=0, step=1, limit=4
    $region2: #{tpu_custom_call.1} parent=1 // loop_pre_header
      _
    $region3: #{tpu_custom_call.1} parent=1 // loop_header
      %s15 = sphi 0, %s19
      %p16 = scmp.ge.s32.totalorder %s15, 4
      %s25 = sphi 0, %s27
      %s28 = sphi 0, %s25
      %s29 = sphi 0, %s28
      %s45 = sphi 0, %s29
      %s49 = sphi 0, %s49
      %s51 = sphi 0, %s49
      %s52 = sphi 0, %s51
      %s66 = sphi 0, %s52
      %s72 = sphi 0, %s74
      %s75 = sphi 0, %s72
      %s76 = sphi 0, %s75
      %s92 = sphi 0, %s76
    $region4: #{tpu_custom_call.1} parent=1 // loop_header_branch
      %18 = sbr.rel (%p16) target = $region8
    $region5: #{tpu_custom_call.1} parent=1 // loop_body
      %s20 = ssub.s32 %s15, 1
      %s21 = ssub.s32 %s15, 2
      %s22 = sadd.s32 %s15, 1
      %s23 = ssub.s32 %s15, %s22
      %p24 = scmp.eq.s32.totalorder %s23, 0
      %s26 = sadd.s32 %s25, 1
      %s27 = scalar_select %p24, %s25, %s26
      %p30 = pneg %p24
      %p31 = scmp.eq.s32.totalorder %s15, 1
      %p32 = por %p30, %p31
      %p33 = scmp.ne.s32.totalorder %s25, %s28
      %p34 = scmp.eq.s32.totalorder %s15, 0
      %p35 = por %p33, %p34
      %p36 = scmp.ne.s32.totalorder %s25, %s28
      %p37 = scmp.eq.s32.totalorder %s20, 1
      %p38 = por %p36, %p37
      %p39 = scmp.ne.s32.totalorder %s28, %s29
      %p40 = scmp.eq.s32.totalorder %s20, 0
      %p41 = por %p39, %p40
      %p42 = scmp.ne.s32.totalorder %s28, %s29
      %p43 = scmp.eq.s32.totalorder %s21, 1
      %p44 = por %p42, %p43
      %p46 = scmp.ne.s32.totalorder %s29, %s45
      %p47 = scmp.eq.s32.totalorder %s21, 0
      %p48 = por %p46, %p47
      %s50 = sadd.s32 %s49, 1
      %p53 = scmp.eq.s32.totalorder %s15, 1
      %p54 = scmp.ne.s32.totalorder %s49, %s51
      %p55 = scmp.eq.s32.totalorder %s15, 0
      %p56 = por %p54, %p55
      %p57 = scmp.ne.s32.totalorder %s49, %s51
      %p58 = scmp.eq.s32.totalorder %s20, 1
      %p59 = por %p57, %p58
      %p60 = scmp.ne.s32.totalorder %s51, %s52
      %p61 = scmp.eq.s32.totalorder %s20, 0
      %p62 = por %p60, %p61
      %p63 = scmp.ne.s32.totalorder %s51, %s52
      %p64 = scmp.eq.s32.totalorder %s21, 1
      %p65 = por %p63, %p64
      %p67 = scmp.ne.s32.totalorder %s52, %s66
      %p68 = scmp.eq.s32.totalorder %s21, 0
      %p69 = por %p67, %p68
      %s70 = ssub.s32 %s15, %s22
      %p71 = scmp.eq.s32.totalorder %s70, 0
      %s73 = sadd.s32 %s72, 1
      %s74 = scalar_select %p71, %s72, %s73
      %p77 = pneg %p71
      %p78 = scmp.eq.s32.totalorder %s15, 1
      %p79 = por %p77, %p78
      %p80 = scmp.ne.s32.totalorder %s72, %s75
      %p81 = scmp.eq.s32.totalorder %s15, 0
      %p82 = por %p80, %p81
      %p83 = scmp.ne.s32.totalorder %s72, %s75
      %p84 = scmp.eq.s32.totalorder %s20, 1
      %p85 = por %p83, %p84
      %p86 = scmp.ne.s32.totalorder %s75, %s76
      %p87 = scmp.eq.s32.totalorder %s20, 0
      %p88 = por %p86, %p87
      %p89 = scmp.ne.s32.totalorder %s75, %s76
      %p90 = scmp.eq.s32.totalorder %s21, 1
      %p91 = por %p89, %p90
      %p93 = scmp.ne.s32.totalorder %s76, %s92
      %p94 = scmp.eq.s32.totalorder %s21, 0
      %p95 = por %p93, %p94
      %p96 = scmp.le.s32.totalorder 1, %s15
      %p97 = scmp.lt.s32.totalorder %s15, 3
      %p98 = pnand %p96, %p97
      %p99 = pneg %p98
      // Predicated region
      $region9: #{tpu_custom_call.1} parent=5 // pred_check
        _
      $region10: #{tpu_custom_call.1} parent=5 // pred_check_branch
        %101 = sbr.rel (%p98) target = $region12
      $region11: #{tpu_custom_call.1} parent=5 // pred_region
        %s102 = ssub.s32 %s15, 1
        // Predicated region
        $region13: #{tpu_custom_call.1} parent=11 // pred_check
          %p103 = pneg %p62
        $region14: #{tpu_custom_call.1} parent=11 // pred_check_branch
          %105 = sbr.rel (%p103) target = $region16
        $region15: #{tpu_custom_call.1} parent=11 // pred_region
          %s107 = ssub.s32 6144, 6144
          %108 = vsyncadd [#allocation6], %s107
          %s109 = sshll.u32 [#allocation5], 4
          %s110 = int_to_ptr.vmem [resolvable:$true] %s109
          %115 = dma.hbm_to_vmem [thread:$0]  %s1, 6144, %s110, [#allocation6], 128, 128, 8
        $region16: #{tpu_custom_call.1} parent=11 // pred_fallthru
          _
      $region12: #{tpu_custom_call.1} parent=5 // pred_fallthru
        _
      %p116 = scmp.lt.s32.totalorder %s15, 2
      // Predicated region
      $region17: #{tpu_custom_call.1} parent=5 // pred_check
        %p117 = pneg %p116
      $region18: #{tpu_custom_call.1} parent=5 // pred_check_branch
        %119 = sbr.rel (%p117) target = $region20
      $region19: #{tpu_custom_call.1} parent=5 // pred_region
        // Predicated region
        $region21: #{tpu_custom_call.1} parent=19 // pred_check
          %p120 = pneg %p35
        $region22: #{tpu_custom_call.1} parent=19 // pred_check_branch
          %122 = sbr.rel (%p120) target = $region24
        $region23: #{tpu_custom_call.1} parent=19 // pred_region
          %s123 = sand.u32 %s25, 1
          %s124 = scalar_lea.sflag [#allocation3], %s123
          %s125 = sand.u32 %s25, 1
          %s126 = smul.addr %s125, 8
          %s127 = scalar_lea.vmem [#allocation2], %s126
          %s129 = ssub.s32 128, 128
          %130 = vsyncadd %s124, %s129
          %s131 = smul.addr %s15, 128
          %s132 = scalar_lea.hbm %s0, %s131
          %s134 = sshll.u32 %s127, 4
          %s135 = int_to_ptr.vmem [resolvable:$true] %s134
          %137 = dma.hbm_to_vmem [thread:$0]  %s132, 128, %s135, %s124
        $region24: #{tpu_custom_call.1} parent=19 // pred_fallthru
          _
      $region20: #{tpu_custom_call.1} parent=5 // pred_fallthru
        _
      %p138 = scmp.le.s32.totalorder 1, %s15
      %p139 = scmp.lt.s32.totalorder %s15, 3
      %p140 = pnand %p138, %p139
      %p141 = pneg %p140
      // Predicated region
      $region25: #{tpu_custom_call.1} parent=5 // pred_check
        _
      $region26: #{tpu_custom_call.1} parent=5 // pred_check_branch
        %143 = sbr.rel (%p140) target = $region28
      $region27: #{tpu_custom_call.1} parent=5 // pred_region
        %s144 = ssub.s32 %s15, 1
        %s145 = sand.u32 %s28, 1
        %s146 = scalar_lea.sflag [#allocation3], %s145
        %s147 = sand.u32 %s28, 1
        %s148 = smul.addr %s147, 8
        %s149 = scalar_lea.vmem [#allocation2], %s148
        // Predicated region
        $region29: #{tpu_custom_call.1} parent=27 // pred_check
          %p150 = pneg %p41
        $region30: #{tpu_custom_call.1} parent=27 // pred_check_branch
          %152 = sbr.rel (%p150) target = $region32
        $region31: #{tpu_custom_call.1} parent=27 // pred_region
          %153 = dma.done %s146, 128
        $region32: #{tpu_custom_call.1} parent=27 // pred_fallthru
          _
        // Predicated region
        $region33: #{tpu_custom_call.1} parent=27 // pred_check
          %p154 = pneg %p62
        $region34: #{tpu_custom_call.1} parent=27 // pred_check_branch
          %156 = sbr.rel (%p154) target = $region36
        $region35: #{tpu_custom_call.1} parent=27 // pred_region
          %157 = dma.done [#allocation6], 6144
        $region36: #{tpu_custom_call.1} parent=27 // pred_fallthru
          _
        %s158 = sand.u32 %s28, 1
        %s159 = scalar_lea.sflag [#allocation3], %s158
        %s160 = sand.u32 %s28, 1
        %s161 = smul.addr %s160, 8
        %s162 = scalar_lea.vmem [#allocation2], %s161
        %p163 = pneg %p41
        %p164 = pneg %p38
        %p165 = pneg %p62
        %p166 = pneg %p59
        %p167 = pneg %p88
        %p168 = pneg %p85
        %s169 = sand.u32 %s75, 1
        %s170 = scalar_lea.sflag [#allocation4], %s169
        %s171 = sand.u32 %s75, 1
        %s172 = smul.addr %s171, 8
        %s173 = scalar_lea.vmem [#allocation7], %s172
        %v174 = vld [vmem:[%s149] sm:$0xff]
        %v175 = vld [vmem:[#allocation5] sm:$0xff]
        %v176 = vld [vmem:[#allocation5 + $0x8] sm:$0xff]
        %v177 = vld [vmem:[#allocation5 + $0x10] sm:$0xff]
        %v178 = vld [vmem:[#allocation5 + $0x18] sm:$0xff]
        %v179 = vld [vmem:[#allocation5 + $0x20] sm:$0xff]
        %v180 = vld [vmem:[#allocation5 + $0x28] sm:$0xff]
        %v181 = vld [vmem:[#allocation5 + $0x30] sm:$0xff]
        %v182 = vld [vmem:[#allocation5 + $0x38] sm:$0xff]
        %v183 = vld [vmem:[#allocation5 + $0x40] sm:$0xff]
        %v184 = vld [vmem:[#allocation5 + $0x48] sm:$0xff]
        %v185 = vld [vmem:[#allocation5 + $0x50] sm:$0xff]
        %v186 = vld [vmem:[#allocation5 + $0x58] sm:$0xff]
        %v187 = vld [vmem:[#allocation5 + $0x60] sm:$0xff]
        %v188 = vld [vmem:[#allocation5 + $0x68] sm:$0xff]
        %v189 = vld [vmem:[#allocation5 + $0x70] sm:$0xff]
        %v190 = vld [vmem:[#allocation5 + $0x78] sm:$0xff]
        %191 = vmatprep.subr.mxu0 0.0
        %192 = vmatpush1.msra.mxu0 %v175
        %193 = vmatprep.subr.mxu0 0.0
        %194 = vmatpush1.msra.mxu0 %v176
        %195 = vmatprep.subr.mxu0 0.0
        %196 = vmatpush1.msra.mxu0 %v177
        %197 = vmatprep.subr.mxu0 0.0
        %198 = vmatpush1.msra.mxu0 %v178
        %199 = vmatprep.subr.mxu0 0.0
        %200 = vmatpush1.msra.mxu0 %v179
        %201 = vmatprep.subr.mxu0 0.0
        %202 = vmatpush1.msra.mxu0 %v180
        %203 = vmatprep.subr.mxu0 0.0
        %204 = vmatpush1.msra.mxu0 %v181
        %205 = vmatprep.subr.mxu0 0.0
        %206 = vmatpush1.msra.mxu0 %v182
        %207 = vmatprep.subr.mxu0 0.0
        %208 = vmatpush1.msra.mxu0 %v183
        %209 = vmatprep.subr.mxu0 0.0
        %210 = vmatpush1.msra.mxu0 %v184
        %211 = vmatprep.subr.mxu0 0.0
        %212 = vmatpush1.msra.mxu0 %v185
        %213 = vmatprep.subr.mxu0 0.0
        %214 = vmatpush1.msra.mxu0 %v186
        %215 = vmatprep.subr.mxu0 0.0
        %216 = vmatpush1.msra.mxu0 %v187
        %217 = vmatprep.subr.mxu0 0.0
        %218 = vmatpush1.msra.mxu0 %v188
        %219 = vmatprep.subr.mxu0 0.0
        %220 = vmatpush1.msra.mxu0 %v189
        %221 = vmatprep.subr.mxu0 0.0
        %222 = vmatpush1.msra.mxu0 %v190
        %223 = vmatprep.subr.mxu0 0.0
        %224 = vmatpush1.msra.mxu0 0.0
        %225 = vmatprep.subr.mxu0 0.0
        %226 = vmatpush1.msra.mxu0 0.0
        %227 = vmatprep.subr.mxu0 0.0
        %228 = vmatpush1.msra.mxu0 0.0
        %229 = vmatprep.subr.mxu0 0.0
        %230 = vmatpush1.msra.mxu0 0.0
        %231 = vmatprep.subr.mxu0 0.0
        %232 = vmatpush1.msra.mxu0 0.0
        %233 = vmatprep.subr.mxu0 0.0
        %234 = vmatpush1.msra.mxu0 0.0
        %235 = vmatprep.subr.mxu0 0.0
        %236 = vmatpush1.msra.mxu0 0.0
        %237 = vmatprep.subr.mxu0 0.0
        %238 = vmatpush1.msra.mxu0 0.0
        %239 = vmatprep.subr.mxu0 0.0
        %240 = vmatpush1.msra.mxu0 0.0
        %241 = vmatprep.subr.mxu0 0.0
        %242 = vmatpush1.msra.mxu0 0.0
        %243 = vmatprep.subr.mxu0 0.0
        %244 = vmatpush1.msra.mxu0 0.0
        %245 = vmatprep.subr.mxu0 0.0
        %246 = vmatpush1.msra.mxu0 0.0
        %247 = vmatprep.subr.mxu0 0.0
        %248 = vmatpush1.msra.mxu0 0.0
        %249 = vmatprep.subr.mxu0 0.0
        %250 = vmatpush1.msra.mxu0 0.0
        %251 = vmatprep.subr.mxu0 0.0
        %252 = vmatpush1.msra.mxu0 0.0
        %253 = vmatprep.subr.mxu0 0.0
        %254 = vmatpush1.msra.mxu0 0.0
        %255 = vmatprep.mubr.f32.mxu0 0.0
        %256 = vmatmul.mubr.f32.gmra.mrb[0].mxu0 %v174
        %v257 = vpop.f32.mrb[0].mxu0
        %v258 = vadd.f32 0.0, %v257
        %v259 = vpop.f32.mrb[0].mxu0
        %260 = vdwg.mxu0
        %v261 = vmul.f32 %v258, 0.5
        %v262 = vmul.f32 %v258, 0.70710677
        %v263 = verf.f32.pop %v262
        %v264 = vadd.f32 %v263, 1.0
        %v265 = vmul.f32 %v261, %v264
        %s266 = scalar_lea.vmem [#allocation5], 128
        %v267 = vld [vmem:[%s266] sm:$0xff]
        %v268 = vld [vmem:[%s266 + $0x8] sm:$0xff]
        %v269 = vld [vmem:[%s266 + $0x10] sm:$0xff]
        %v270 = vld [vmem:[%s266 + $0x18] sm:$0xff]
        %v271 = vld [vmem:[%s266 + $0x20] sm:$0xff]
        %v272 = vld [vmem:[%s266 + $0x28] sm:$0xff]
        %v273 = vld [vmem:[%s266 + $0x30] sm:$0xff]
        %v274 = vld [vmem:[%s266 + $0x38] sm:$0xff]
        %v275 = vld [vmem:[%s266 + $0x40] sm:$0xff]
        %v276 = vld [vmem:[%s266 + $0x48] sm:$0xff]
        %v277 = vld [vmem:[%s266 + $0x50] sm:$0xff]
        %v278 = vld [vmem:[%s266 + $0x58] sm:$0xff]
        %v279 = vld [vmem:[%s266 + $0x60] sm:$0xff]
        %v280 = vld [vmem:[%s266 + $0x68] sm:$0xff]
        %v281 = vld [vmem:[%s266 + $0x70] sm:$0xff]
        %v282 = vld [vmem:[%s266 + $0x78] sm:$0xff]
        %283 = vmatprep.subr.mxu0 0.0
        %284 = vmatpush1.msra.mxu0 %v267
        %285 = vmatprep.subr.mxu0 0.0
        %286 = vmatpush1.msra.mxu0 %v268
        %287 = vmatprep.subr.mxu0 0.0
        %288 = vmatpush1.msra.mxu0 %v269
        %289 = vmatprep.subr.mxu0 0.0
        %290 = vmatpush1.msra.mxu0 %v270
        %291 = vmatprep.subr.mxu0 0.0
        %292 = vmatpush1.msra.mxu0 %v271
        %293 = vmatprep.subr.mxu0 0.0
        %294 = vmatpush1.msra.mxu0 %v272
        %295 = vmatprep.subr.mxu0 0.0
        %296 = vmatpush1.msra.mxu0 %v273
        %297 = vmatprep.subr.mxu0 0.0
        %298 = vmatpush1.msra.mxu0 %v274
        %299 = vmatprep.subr.mxu0 0.0
        %300 = vmatpush1.msra.mxu0 %v275
        %301 = vmatprep.subr.mxu0 0.0
        %302 = vmatpush1.msra.mxu0 %v276
        %303 = vmatprep.subr.mxu0 0.0
        %304 = vmatpush1.msra.mxu0 %v277
        %305 = vmatprep.subr.mxu0 0.0
        %306 = vmatpush1.msra.mxu0 %v278
        %307 = vmatprep.subr.mxu0 0.0
        %308 = vmatpush1.msra.mxu0 %v279
        %309 = vmatprep.subr.mxu0 0.0
        %310 = vmatpush1.msra.mxu0 %v280
        %311 = vmatprep.subr.mxu0 0.0
        %312 = vmatpush1.msra.mxu0 %v281
        %313 = vmatprep.subr.mxu0 0.0
        %314 = vmatpush1.msra.mxu0 %v282
        %315 = vmatprep.subr.mxu0 0.0
        %316 = vmatpush1.msra.mxu0 0.0
        %317 = vmatprep.subr.mxu0 0.0
        %318 = vmatpush1.msra.mxu0 0.0
        %319 = vmatprep.subr.mxu0 0.0
        %320 = vmatpush1.msra.mxu0 0.0
        %321 = vmatprep.subr.mxu0 0.0
        %322 = vmatpush1.msra.mxu0 0.0
        %323 = vmatprep.subr.mxu0 0.0
        %324 = vmatpush1.msra.mxu0 0.0
        %325 = vmatprep.subr.mxu0 0.0
        %326 = vmatpush1.msra.mxu0 0.0
        %327 = vmatprep.subr.mxu0 0.0
        %328 = vmatpush1.msra.mxu0 0.0
        %329 = vmatprep.subr.mxu0 0.0
        %330 = vmatpush1.msra.mxu0 0.0
        %331 = vmatprep.subr.mxu0 0.0
        %332 = vmatpush1.msra.mxu0 0.0
        %333 = vmatprep.subr.mxu0 0.0
        %334 = vmatpush1.msra.mxu0 0.0
        %335 = vmatprep.subr.mxu0 0.0
        %336 = vmatpush1.msra.mxu0 0.0
        %337 = vmatprep.subr.mxu0 0.0
        %338 = vmatpush1.msra.mxu0 0.0
        %339 = vmatprep.subr.mxu0 0.0
        %340 = vmatpush1.msra.mxu0 0.0
        %341 = vmatprep.subr.mxu0 0.0
        %342 = vmatpush1.msra.mxu0 0.0
        %343 = vmatprep.subr.mxu0 0.0
        %344 = vmatpush1.msra.mxu0 0.0
        %345 = vmatprep.subr.mxu0 0.0
        %346 = vmatpush1.msra.mxu0 0.0
        %347 = vmatprep.mubr.f32.mxu0 0.0
        %348 = vmatmul.mubr.f32.gmra.mrb[0].mxu0 %v265
        %v349 = vpop.f32.mrb[0].mxu0
        %v350 = vadd.f32 0.0, %v349
        %v351 = vpop.f32.mrb[0].mxu0
        %352 = vdwg.mxu0
        %v353 = vmul.f32 %v350, 0.5
        %v354 = vmul.f32 %v350, 0.70710677
        %v355 = verf.f32.pop %v354
        %v356 = vadd.f32 %v355, 1.0
        %v357 = vmul.f32 %v353, %v356
        %s358 = scalar_lea.vmem [#allocation5], 256
        %v359 = vld [vmem:[%s358] sm:$0xff]
        %v360 = vld [vmem:[%s358 + $0x8] sm:$0xff]
        %v361 = vld [vmem:[%s358 + $0x10] sm:$0xff]
        %v362 = vld [vmem:[%s358 + $0x18] sm:$0xff]
        %v363 = vld [vmem:[%s358 + $0x20] sm:$0xff]
        %v364 = vld [vmem:[%s358 + $0x28] sm:$0xff]
        %v365 = vld [vmem:[%s358 + $0x30] sm:$0xff]
        %v366 = vld [vmem:[%s358 + $0x38] sm:$0xff]
        %v367 = vld [vmem:[%s358 + $0x40] sm:$0xff]
        %v368 = vld [vmem:[%s358 + $0x48] sm:$0xff]
        %v369 = vld [vmem:[%s358 + $0x50] sm:$0xff]
        %v370 = vld [vmem:[%s358 + $0x58] sm:$0xff]
        %v371 = vld [vmem:[%s358 + $0x60] sm:$0xff]
        %v372 = vld [vmem:[%s358 + $0x68] sm:$0xff]
        %v373 = vld [vmem:[%s358 + $0x70] sm:$0xff]
        %v374 = vld [vmem:[%s358 + $0x78] sm:$0xff]
        %375 = vmatprep.subr.mxu0 0.0
        %376 = vmatpush1.msra.mxu0 %v359
        %377 = vmatprep.subr.mxu0 0.0
        %378 = vmatpush1.msra.mxu0 %v360
        %379 = vmatprep.subr.mxu0 0.0
        %380 = vmatpush1.msra.mxu0 %v361
        %381 = vmatprep.subr.mxu0 0.0
        %382 = vmatpush1.msra.mxu0 %v362
        %383 = vmatprep.subr.mxu0 0.0
        %384 = vmatpush1.msra.mxu0 %v363
        %385 = vmatprep.subr.mxu0 0.0
        %386 = vmatpush1.msra.mxu0 %v364
        %387 = vmatprep.subr.mxu0 0.0
        %388 = vmatpush1.msra.mxu0 %v365
        %389 = vmatprep.subr.mxu0 0.0
        %390 = vmatpush1.msra.mxu0 %v366
        %391 = vmatprep.subr.mxu0 0.0
        %392 = vmatpush1.msra.mxu0 %v367
        %393 = vmatprep.subr.mxu0 0.0
        %394 = vmatpush1.msra.mxu0 %v368
        %395 = vmatprep.subr.mxu0 0.0
        %396 = vmatpush1.msra.mxu0 %v369
        %397 = vmatprep.subr.mxu0 0.0
        %398 = vmatpush1.msra.mxu0 %v370
        %399 = vmatprep.subr.mxu0 0.0
        %400 = vmatpush1.msra.mxu0 %v371
        %401 = vmatprep.subr.mxu0 0.0
        %402 = vmatpush1.msra.mxu0 %v372
        %403 = vmatprep.subr.mxu0 0.0
        %404 = vmatpush1.msra.mxu0 %v373
        %405 = vmatprep.subr.mxu0 0.0
        %406 = vmatpush1.msra.mxu0 %v374
        %407 = vmatprep.subr.mxu0 0.0
        %408 = vmatpush1.msra.mxu0 0.0
        %409 = vmatprep.subr.mxu0 0.0
        %410 = vmatpush1.msra.mxu0 0.0
        %411 = vmatprep.subr.mxu0 0.0
        %412 = vmatpush1.msra.mxu0 0.0
        %413 = vmatprep.subr.mxu0 0.0
        %414 = vmatpush1.msra.mxu0 0.0
        %415 = vmatprep.subr.mxu0 0.0
        %416 = vmatpush1.msra.mxu0 0.0
        %417 = vmatprep.subr.mxu0 0.0
        %418 = vmatpush1.msra.mxu0 0.0
        %419 = vmatprep.subr.mxu0 0.0
        %420 = vmatpush1.msra.mxu0 0.0
        %421 = vmatprep.subr.mxu0 0.0
        %422 = vmatpush1.msra.mxu0 0.0
        %423 = vmatprep.subr.mxu0 0.0
        %424 = vmatpush1.msra.mxu0 0.0
        %425 = vmatprep.subr.mxu0 0.0
        %426 = vmatpush1.msra.mxu0 0.0
        %427 = vmatprep.subr.mxu0 0.0
        %428 = vmatpush1.msra.mxu0 0.0
        %429 = vmatprep.subr.mxu0 0.0
        %430 = vmatpush1.msra.mxu0 0.0
        %431 = vmatprep.subr.mxu0 0.0
        %432 = vmatpush1.msra.mxu0 0.0
        %433 = vmatprep.subr.mxu0 0.0
        %434 = vmatpush1.msra.mxu0 0.0
        %435 = vmatprep.subr.mxu0 0.0
        %436 = vmatpush1.msra.mxu0 0.0
        %437 = vmatprep.subr.mxu0 0.0
        %438 = vmatpush1.msra.mxu0 0.0
        %439 = vmatprep.mubr.f32.mxu0 0.0
        %440 = vmatmul.mubr.f32.gmra.mrb[0].mxu0 %v357
        %v441 = vpop.f32.mrb[0].mxu0
        %v442 = vadd.f32 0.0, %v441
        %v443 = vpop.f32.mrb[0].mxu0
        %444 = vdwg.mxu0
        %445 = vst [vmem:[%s173] sm:$0xff] %v442
        %s446 = sand.u32 %s75, 1
        %s447 = scalar_lea.sflag [#allocation4], %s446
        %s448 = sand.u32 %s75, 1
        %s449 = smul.addr %s448, 8
        %s450 = scalar_lea.vmem [#allocation7], %s449
        // Predicated region
        $region37: #{tpu_custom_call.1} parent=27 // pred_check
          %p451 = pneg %p85
        $region38: #{tpu_custom_call.1} parent=27 // pred_check_branch
          %453 = sbr.rel (%p451) target = $region40
        $region39: #{tpu_custom_call.1} parent=27 // pred_region
          %s455 = ssub.s32 128, 128
          %456 = vsyncadd %s447, %s455
          %s457 = smul.addr %s20, 128
          %s458 = scalar_lea.hbm %s2, %s457
          %s460 = sshll.u32 %s450, 4
          %s461 = int_to_ptr.vmem [resolvable:$true] %s460
          %463 = dma.vmem_to_hbm [thread:$0]  %s461, 128, %s458, %s447
        $region40: #{tpu_custom_call.1} parent=27 // pred_fallthru
          _
      $region28: #{tpu_custom_call.1} parent=5 // pred_fallthru
        _
      %p464 = scmp.le.s32.totalorder 2, %s15
      // Predicated region
      $region41: #{tpu_custom_call.1} parent=5 // pred_check
        %p465 = pneg %p464
      $region42: #{tpu_custom_call.1} parent=5 // pred_check_branch
        %467 = sbr.rel (%p465) target = $region44
      $region43: #{tpu_custom_call.1} parent=5 // pred_region
        %s468 = ssub.s32 %s15, 2
        // Predicated region
        $region45: #{tpu_custom_call.1} parent=43 // pred_check
          %p469 = pneg %p91
        $region46: #{tpu_custom_call.1} parent=43 // pred_check_branch
          %471 = sbr.rel (%p469) target = $region48
        $region47: #{tpu_custom_call.1} parent=43 // pred_region
          %s472 = sand.u32 %s76, 1
          %s473 = scalar_lea.sflag [#allocation4], %s472
          %s474 = sand.u32 %s76, 1
          %s475 = smul.addr %s474, 8
          %s476 = scalar_lea.vmem [#allocation7], %s475
          %477 = dma.done %s473, 128
        $region48: #{tpu_custom_call.1} parent=43 // pred_fallthru
          _
      $region44: #{tpu_custom_call.1} parent=5 // pred_fallthru
        _
    $region6: #{tpu_custom_call.1} parent=1 // loop_footer
      %s19 = sadd.s32 1, %s15
    $region7: #{tpu_custom_call.1} parent=1 // loop_footer_branch
      %14 = sbr.rel target = $region3
    $region8: #{tpu_custom_call.1} parent=1 // loop_exit
      _
    %478 = vsyncpa [#allocation3], 1
    %s479 = scalar_lea.sflag [#allocation3], 1
    %480 = vsyncpa %s479, 1
    %481 = vsyncpa [#allocation6], 1
    %482 = vsyncpa [#allocation4], 1
    %s483 = scalar_lea.sflag [#allocation4], 1
    %484 = vsyncpa %s483, 1

</llo_original>
